<compile_context>
chip_gen: v5e
topology: v5e:2x2
jax: 0.10.0
libtpu: 0.0.40
codegen_flags: <defaults>
</compile_context>

<pallas_src>
import functools
import math

import jax
import jax.numpy as jnp
from jax.experimental import pallas as pl
from jax.experimental.pallas import tpu as pltpu


def _round_up(x, m):
    return ((x + m - 1) // m) * m


def _cdiv(a, b):
    return -(-a // b)


# ----------------------------------------------------------------------------
# Per-point func MLP, lane-dense: points on the lane (last) axis.
#   pts   (3, tile_n)
#   wxt   (20, 3)   = 0.5 * Wfx^T                      (sigmoid 0.5x folded in)
#   b1    (20, 1)   = 0.5 * (latent @ Wfl + bf1)^T     (latent + 0.5x folded in)
#   w2t   (4, 20)   = 0.25 * Wf2^T                     (hidden 0.5t+0.5 and 0.5x folded in)
#   b2    (4, 1)    = 0.25 * Wf2^T @ 1 + 0.5 * bf2^T
#   out   (4, tile_n) = 0.5 * tanh(w2t @ tanh(wxt @ pts + b1) + b2) + 0.5
# This is algebraically identical to sigmoid(W2 @ sigmoid(W1 @ [x;latent] + b1) + b2).
# ----------------------------------------------------------------------------
def _make_func_kernel(hidden_tanh_bf16):
    def func_kernel(pts_ref, wxt_ref, b1_ref, w2t_ref, b2_ref, out_ref):
        h = jnp.dot(wxt_ref[...], pts_ref[...],
                    preferred_element_type=jnp.float32) + b1_ref[...]   # (20, tile_n)
        if hidden_tanh_bf16:
            # v6e/v7x EUP has a ~2x bf16 tanh path; costs ~1e-3-level error.
            t = jnp.tanh(h.astype(jnp.bfloat16)).astype(jnp.float32)
        else:
            t = jnp.tanh(h)
        u = jnp.dot(w2t_ref[...], t,
                    preferred_element_type=jnp.float32) + b2_ref[...]   # (4, tile_n)
        out_ref[...] = (0.5 * jnp.tanh(u) + 0.5).astype(out_ref.dtype)
    return func_kernel


# ----------------------------------------------------------------------------
# Wrapper-side parameter prep (tiny, done once per forward)
# ----------------------------------------------------------------------------
def _prepare_func_params(z, params):
    sig = jax.nn.sigmoid
    z2 = z.reshape(1, 30).astype(jnp.float32)

    # latent MLP (1x30 -> 1x320) in plain JAX: too tiny for its own kernel.
    lat = sig(z2 @ params["Wl1"] + params["bl1"])
    lat = sig(lat @ params["Wl2"] + params["bl2"])
    lat = sig(lat @ params["Wl3"] + params["bl3"])                       # (1, 320)

    # Hoist loop-invariant latent contribution into the first-layer bias and
    # fold the sigmoid affine constants (exact algebra) into the weights.
    wxt = (0.5 * params["Wfx"].T).astype(jnp.float32)                    # (20, 3)
    b1 = (0.5 * (lat @ params["Wfl"] + params["bf1"]).T).astype(jnp.float32)   # (20, 1)
    w2t_full = params["Wf2"].T.astype(jnp.float32)                       # (4, 20)
    w2t = 0.25 * w2t_full                                                # (4, 20)
    b2 = (0.25 * jnp.sum(w2t_full, axis=1, keepdims=True)
          + 0.5 * params["bf2"].T.astype(jnp.float32))                   # (4, 1)
    return wxt, b1, w2t, b2


# ----------------------------------------------------------------------------
# Kernel launcher: pts_t (3, N) channel-major in, (4, N) channel-major out.
# ----------------------------------------------------------------------------
def _run_func_kernel(pts_t, wxt, b1, w2t, b2, N, *, tile_n, out_dtype,
                     hidden_tanh_bf16):
    n_pad = _round_up(max(N, 1), 128)

    # Tile sizing: multiples of 128 lanes; clamp to the (padded) point count;
    # ensure >= 2 grid steps when there is enough work so the v7x megacore
    # split via dimension_semantics=("parallel",) has something to shard.
    tile_n = max(128, _round_up(min(tile_n, n_pad), 128))
    if n_pad >= 2 * 128:
        tile_n = min(tile_n, _round_up(_cdiv(n_pad, 2), 128))
    grid = (_cdiv(N, tile_n),)

    # Scoped-VMEM limit: double-buffered in/out blocks (sublane-padded to 8)
    # plus the (20, tile_n) hidden intermediate, with margin.  Capped at 64 MiB
    # so it never exceeds v7x physical VMEM; v5e's 16 MiB default would
    # otherwise choke on >=48K-lane tiles.
    est_vmem = 4 * tile_n * (2 * (8 + 8) + 24)
    vmem_limit = int(min(64 * 2**20, max(32 * 2**20, 3 * est_vmem)))

    cost = pl.CostEstimate(
        flops=2 * N * (3 * 20 + 20 * 4),
        transcendentals=24 * N,
        bytes_accessed=28 * N,
    )

    return pl.pallas_call(
        _make_func_kernel(hidden_tanh_bf16),
        out_shape=jax.ShapeDtypeStruct((4, N), out_dtype),
        grid=grid,
        in_specs=[
            pl.BlockSpec((3, tile_n), lambda i: (0, i)),   # points tile (lane-dense)
            pl.BlockSpec((20, 3),     lambda i: (0, 0)),   # 0.5 * Wfx^T
            pl.BlockSpec((20, 1),     lambda i: (0, 0)),   # fused/scaled bias
            pl.BlockSpec((4, 20),     lambda i: (0, 0)),   # 0.25 * Wf2^T
            pl.BlockSpec((4, 1),      lambda i: (0, 0)),   # fused second bias
        ],
        out_specs=pl.BlockSpec((4, tile_n), lambda i: (0, i)),
        compiler_params=pltpu.CompilerParams(
            dimension_semantics=("parallel",),
            vmem_limit_bytes=vmem_limit,
        ),
        cost_estimate=cost,
    )(pts_t, wxt, b1, w2t, b2)


# ----------------------------------------------------------------------------
# Public entry points
# ----------------------------------------------------------------------------
def latent_space_forward(X, z, params, *, tile_n=32768, out_dtype=jnp.float32,
                         hidden_tanh_bf16=False):
    """Module-compatible interface: X (..., 3), z (30,) -> (..., 4)."""
    N = math.prod(X.shape[:-1])
    assert X.shape[-1] == 3

    # TODO(synk): the (N,3)->(3,N) input and (4,N)->(N,4) output transposes are
    # separate HBM-materialized XLA ops (~56 B/pt on top of the kernel's
    # 28 B/pt).  A producer/consumer that adopts channel-major layout should
    # call latent_space_forward_channel_major() instead to eliminate them.
    pts_t = X.reshape(N, 3).T.astype(jnp.float32)                        # (3, N)
    wxt, b1, w2t, b2 = _prepare_func_params(z, params)
    out_t = _run_func_kernel(pts_t, wxt, b1, w2t, b2, N, tile_n=tile_n,
                             out_dtype=out_dtype,
                             hidden_tanh_bf16=hidden_tanh_bf16)          # (4, N)
    return out_t.T.reshape(X.shape[:-1] + (4,))


def latent_space_forward_channel_major(pts_cm, z, params, *, tile_n=32768,
                                       out_dtype=jnp.float32,
                                       hidden_tanh_bf16=False):
    """Transpose-free interface: pts (3, N) channel-major -> (4, N) channel-major."""
    assert pts_cm.shape[0] == 3
    N = pts_cm.shape[1]
    wxt, b1, w2t, b2 = _prepare_func_params(z, params)
    return _run_func_kernel(pts_cm.astype(jnp.float32), wxt, b1, w2t, b2, N,
                            tile_n=tile_n, out_dtype=out_dtype,
                            hidden_tanh_bf16=hidden_tanh_bf16)


# ----------------------------------------------------------------------------
# Deterministic parameter init (nn.Linear shapes, stored as (in, out))
# ----------------------------------------------------------------------------
def init_params(key):
    ks = jax.random.split(key, 10)

    def lin(kw, kb, fan_in, fan_out):
        # PyTorch nn.Linear weight is (out, in); we store the transpose (in, out).
        w = 0.1 * jax.random.normal(kw, (fan_out, fan_in), jnp.float32)
        b = 0.1 * jax.random.normal(kb, (1, fan_out), jnp.float32)
        return w.T, b

    Wl1, bl1 = lin(ks[0], ks[1], 30, 40)
    Wl2, bl2 = lin(ks[2], ks[3], 40, 80)
    Wl3, bl3 = lin(ks[4], ks[5], 80, 320)
    Wf1, bf1 = lin(ks[6], ks[7], 323, 20)   # func first Linear: in = 3 + 320
    Wf2, bf2 = lin(ks[8], ks[9], 20, 4)

    return {
        "Wl1": Wl1, "bl1": bl1,
        "Wl2": Wl2, "bl2": bl2,
        "Wl3": Wl3, "bl3": bl3,
        "Wfx": Wf1[:3, :],     # (3, 20)   rows multiplying the point coords
        "Wfl": Wf1[3:, :],     # (320, 20) rows multiplying the latent
        "bf1": bf1,
        "Wf2": Wf2, "bf2": bf2,
    }


# ----------------------------------------------------------------------------
# Pure-JAX reference (for correctness check)
# ----------------------------------------------------------------------------
def reference_forward(X, z, p):
    sig = jax.nn.sigmoid
    lat = sig(sig(sig(z.reshape(1, 30) @ p["Wl1"] + p["bl1"]) @ p["Wl2"] + p["bl2"])
              @ p["Wl3"] + p["bl3"])                      # (1, 320)
    N = math.prod(X.shape[:-1])
    pts = X.reshape(N, 3)
    cat = jnp.concatenate([pts, jnp.broadcast_to(lat, (N, 320))], axis=1)
    W1 = jnp.concatenate([p["Wfx"], p["Wfl"]], axis=0)    # (323, 20)
    h = sig(cat @ W1 + p["bf1"])
    o = sig(h @ p["Wf2"] + p["bf2"])
    return o.reshape(X.shape[:-1] + (4,))


if __name__ == "__main__":
    key = jax.random.PRNGKey(0)
    k_params, k_x, k_z = jax.random.split(key, 3)

    params = init_params(k_params)

    # Small shapes consistent with the module: X = (..., 3), z = (30,)
    X = jax.random.normal(k_x, (2, 16, 16, 3), jnp.float32)   # N = 512 points
    z = jax.random.normal(k_z, (30,), jnp.float32)

    fwd = jax.jit(functools.partial(latent_space_forward))
    out = jax.block_until_ready(fwd(X, z, params))

    ref = reference_forward(X, z, params)
    assert out.shape == (2, 16, 16, 4), out.shape
    assert jnp.allclose(out, ref, atol=1e-5, rtol=1e-5), "mismatch vs reference"

    # Transpose-free channel-major path (for producers/consumers that adopt
    # (3, N)/(4, N) layouts end-to-end).
    pts_cm = X.reshape(-1, 3).T
    out_cm = jax.block_until_ready(
        latent_space_forward_channel_major(pts_cm, z, params))
    assert out_cm.shape == (4, 512), out_cm.shape
    assert jnp.allclose(out_cm.T.reshape(X.shape[:-1] + (4,)), ref,
                        atol=1e-5, rtol=1e-5), "channel-major mismatch"

    print("KERNEL_OK")
</pallas_src>

<mosaic_0001>
module attributes {stable_mosaic.version = 11 : i64} {
  func.func @func_kernel(%arg0: i32, %arg1: memref<3x256xf32, #tpu.memory_space<vmem>>, %arg2: memref<20x3xf32, #tpu.memory_space<vmem>>, %arg3: memref<20x1xf32, #tpu.memory_space<vmem>>, %arg4: memref<4x20xf32, #tpu.memory_space<vmem>>, %arg5: memref<4x1xf32, #tpu.memory_space<vmem>>, %arg6: memref<4x256xf32, #tpu.memory_space<vmem>>) attributes {dimension_semantics = [#tpu.dimension_semantics<parallel>], iteration_bounds = array<i64: 2>, scalar_prefetch = 0 : i64, scratch_operands = 0 : i64, tpu.core_type = #tpu.core_type<tc>, window_params = [{transform_indices = @transform_0, window_bounds = array<i64: 3, 256>}, {pipeline_mode = #tpu.pipeline_mode<synchronous>, transform_indices = @transform_1, window_bounds = array<i64: 20, 3>}, {pipeline_mode = #tpu.pipeline_mode<synchronous>, transform_indices = @transform_2, window_bounds = array<i64: 20, 1>}, {pipeline_mode = #tpu.pipeline_mode<synchronous>, transform_indices = @transform_3, window_bounds = array<i64: 4, 20>}, {pipeline_mode = #tpu.pipeline_mode<synchronous>, transform_indices = @transform_4, window_bounds = array<i64: 4, 1>}, {transform_indices = @transform_5, window_bounds = array<i64: 4, 256>}]} {
    %c0 = arith.constant 0 : index
    %c0_0 = arith.constant 0 : index
    %0 = vector.load %arg2[%c0, %c0_0] : memref<20x3xf32, #tpu.memory_space<vmem>>, vector<20x3xf32>
    %c0_1 = arith.constant 0 : index
    %c0_2 = arith.constant 0 : index
    %1 = vector.load %arg1[%c0_1, %c0_2] : memref<3x256xf32, #tpu.memory_space<vmem>>, vector<3x256xf32>
    %cst = arith.constant dense<0.000000e+00> : vector<20x256xf32>
    %2 = tpu.matmul %0, %1, %cst {dimension_numbers = #tpu.dot_dimension_numbers<[1], [0], [0], [1], [0, 0, 1, 1], [], []>} : vector<20x3xf32>, vector<3x256xf32>, vector<20x256xf32> -> vector<20x256xf32>
    %c0_3 = arith.constant 0 : index
    %c0_4 = arith.constant 0 : index
    %3 = vector.load %arg3[%c0_3, %c0_4] : memref<20x1xf32, #tpu.memory_space<vmem>>, vector<20x1xf32>
    %4 = vector.broadcast %3 : vector<20x1xf32> to vector<20x256xf32>
    %5 = arith.addf %2, %4 : vector<20x256xf32>
    %6 = math.tanh %5 : vector<20x256xf32>
    %c0_5 = arith.constant 0 : index
    %c0_6 = arith.constant 0 : index
    %7 = vector.load %arg4[%c0_5, %c0_6] : memref<4x20xf32, #tpu.memory_space<vmem>>, vector<4x20xf32>
    %cst_7 = arith.constant dense<0.000000e+00> : vector<4x256xf32>
    %8 = tpu.matmul %7, %6, %cst_7 {dimension_numbers = #tpu.dot_dimension_numbers<[1], [0], [0], [1], [0, 0, 1, 1], [], []>} : vector<4x20xf32>, vector<20x256xf32>, vector<4x256xf32> -> vector<4x256xf32>
    %c0_8 = arith.constant 0 : index
    %c0_9 = arith.constant 0 : index
    %9 = vector.load %arg5[%c0_8, %c0_9] : memref<4x1xf32, #tpu.memory_space<vmem>>, vector<4x1xf32>
    %10 = vector.broadcast %9 : vector<4x1xf32> to vector<4x256xf32>
    %11 = arith.addf %8, %10 : vector<4x256xf32>
    %12 = math.tanh %11 : vector<4x256xf32>
    %cst_10 = arith.constant 5.000000e-01 : f32
    %13 = vector.broadcast %cst_10 : f32 to vector<4x256xf32>
    %14 = arith.mulf %13, %12 : vector<4x256xf32>
    %cst_11 = arith.constant 5.000000e-01 : f32
    %15 = vector.broadcast %cst_11 : f32 to vector<4x256xf32>
    %16 = arith.addf %14, %15 : vector<4x256xf32>
    %c0_12 = arith.constant 0 : index
    %c0_13 = arith.constant 0 : index
    %17 = vector.load %arg6[%c0_12, %c0_13] : memref<4x256xf32, #tpu.memory_space<vmem>>, vector<4x256xf32>
    tpu.vector_store %arg6[%c0_12, %c0_13], %16 {strides = array<i32>} : memref<4x256xf32, #tpu.memory_space<vmem>>, vector<4x256xf32>,
    return
  }
  func.func @transform_0(%arg0: i32) -> (i32, i32) {
    %c0_i32 = arith.constant 0 : i32
    %c0_i32_0 = arith.constant 0 : i32
    return %c0_i32, %arg0 : i32, i32
  }
  func.func @transform_1(%arg0: i32) -> (i32, i32) {
    %c0_i32 = arith.constant 0 : i32
    %c0_i32_0 = arith.constant 0 : i32
    %c0_i32_1 = arith.constant 0 : i32
    return %c0_i32, %c0_i32_0 : i32, i32
  }
  func.func @transform_2(%arg0: i32) -> (i32, i32) {
    %c0_i32 = arith.constant 0 : i32
    %c0_i32_0 = arith.constant 0 : i32
    %c0_i32_1 = arith.constant 0 : i32
    return %c0_i32, %c0_i32_0 : i32, i32
  }
  func.func @transform_3(%arg0: i32) -> (i32, i32) {
    %c0_i32 = arith.constant 0 : i32
    %c0_i32_0 = arith.constant 0 : i32
    %c0_i32_1 = arith.constant 0 : i32
    return %c0_i32, %c0_i32_0 : i32, i32
  }
  func.func @transform_4(%arg0: i32) -> (i32, i32) {
    %c0_i32 = arith.constant 0 : i32
    %c0_i32_0 = arith.constant 0 : i32
    %c0_i32_1 = arith.constant 0 : i32
    return %c0_i32, %c0_i32_0 : i32, i32
  }
  func.func @transform_5(%arg0: i32) -> (i32, i32) {
    %c0_i32 = arith.constant 0 : i32
    %c0_i32_0 = arith.constant 0 : i32
    return %c0_i32, %arg0 : i32, i32
  }
}

</mosaic_0001>

<llo_original>
// kernel: latent_space_forward.1
$region0: #{latent_space_forward.1}
  #allocation0 [shape = 'u32[]', space=smem, size = 0x4, offset = 0x4, fixed_abs, tag = 'smem constant byte address 0x4 - core index']
  #allocation1 [shape = 'u32[72,128]{1,0:T(1,128)}', space=vmem, size = 0x9000, scoped, tag = 'internal scratch']
  %s0 = inlined_call_operand.vmem [shape: f32[3,512], index: 0, kind: input, shape index: {}]
  %s1 = inlined_call_operand.vmem [shape: f32[20,3], index: 1, kind: input, shape index: {}]
  %s2 = inlined_call_operand.vmem [shape: f32[20,1], index: 2, kind: input, shape index: {}]
  %s3 = inlined_call_operand.vmem [shape: f32[4,20], index: 3, kind: input, shape index: {}]
  %s4 = inlined_call_operand.vmem [shape: f32[4,1], index: 4, kind: input, shape index: {}]
  %s5 = inlined_call_operand.vmem [shape: f32[4,512], index: 5, kind: output, shape index: {}]
  %s6 = sld [smem:[#allocation0]]
  $region53: #{latent_space_forward.1} parent=0
    _
  %s8 = ssub.s32 1, %s6
  %s9 = scalar_select 0, %s8, %s6
  loop: start=0, step=1, limit=4
  $region2: #{latent_space_forward.1} parent=0 // loop_pre_header
    _
  $region3: #{latent_space_forward.1} parent=0 // loop_header
    %s11 = sphi 0, %s15
    %p12 = scmp.ge.s32.totalorder %s11, 4
    %s21 = sphi 0, %s23
    %s24 = sphi 0, %s21
    %s25 = sphi 0, %s24
    %s41 = sphi 0, %s25
    %s45 = sphi 0, %s45
    %s47 = sphi 0, %s45
    %s48 = sphi 0, %s47
    %s62 = sphi 0, %s48
    %s66 = sphi 0, %s66
    %s68 = sphi 0, %s66
    %s69 = sphi 0, %s68
    %s83 = sphi 0, %s69
    %s87 = sphi 0, %s87
    %s89 = sphi 0, %s87
    %s90 = sphi 0, %s89
    %s104 = sphi 0, %s90
    %s108 = sphi 0, %s108
    %s110 = sphi 0, %s108
    %s111 = sphi 0, %s110
    %s125 = sphi 0, %s111
    %s131 = sphi 0, %s133
    %s134 = sphi 0, %s131
    %s135 = sphi 0, %s134
    %s151 = sphi 0, %s135
  $region4: #{latent_space_forward.1} parent=0 // loop_header_branch
    %14 = sbr.rel (%p12) target = $region8
  $region5: #{latent_space_forward.1} parent=0 // loop_body
    %s16 = ssub.s32 %s11, 1
    %s17 = ssub.s32 %s11, 2
    %s18 = sadd.s32 %s11, 1
    %s19 = ssub.s32 %s11, %s18
    %p20 = scmp.eq.s32.totalorder %s19, 0
    %s22 = sadd.s32 %s21, 1
    %s23 = scalar_select %p20, %s21, %s22
    %p26 = pneg %p20
    %p27 = scmp.eq.s32.totalorder %s11, 1
    %p28 = por %p26, %p27
    %p29 = scmp.ne.s32.totalorder %s21, %s24
    %p30 = scmp.eq.s32.totalorder %s11, 0
    %p31 = por %p29, %p30
    %p32 = scmp.ne.s32.totalorder %s21, %s24
    %p33 = scmp.eq.s32.totalorder %s16, 1
    %p34 = por %p32, %p33
    %p35 = scmp.ne.s32.totalorder %s24, %s25
    %p36 = scmp.eq.s32.totalorder %s16, 0
    %p37 = por %p35, %p36
    %p38 = scmp.ne.s32.totalorder %s24, %s25
    %p39 = scmp.eq.s32.totalorder %s17, 1
    %p40 = por %p38, %p39
    %p42 = scmp.ne.s32.totalorder %s25, %s41
    %p43 = scmp.eq.s32.totalorder %s17, 0
    %p44 = por %p42, %p43
    %s46 = sadd.s32 %s45, 1
    %p49 = scmp.eq.s32.totalorder %s11, 1
    %p50 = scmp.ne.s32.totalorder %s45, %s47
    %p51 = scmp.eq.s32.totalorder %s11, 0
    %p52 = por %p50, %p51
    %p53 = scmp.ne.s32.totalorder %s45, %s47
    %p54 = scmp.eq.s32.totalorder %s16, 1
    %p55 = por %p53, %p54
    %p56 = scmp.ne.s32.totalorder %s47, %s48
    %p57 = scmp.eq.s32.totalorder %s16, 0
    %p58 = por %p56, %p57
    %p59 = scmp.ne.s32.totalorder %s47, %s48
    %p60 = scmp.eq.s32.totalorder %s17, 1
    %p61 = por %p59, %p60
    %p63 = scmp.ne.s32.totalorder %s48, %s62
    %p64 = scmp.eq.s32.totalorder %s17, 0
    %p65 = por %p63, %p64
    %s67 = sadd.s32 %s66, 1
    %p70 = scmp.eq.s32.totalorder %s11, 1
    %p71 = scmp.ne.s32.totalorder %s66, %s68
    %p72 = scmp.eq.s32.totalorder %s11, 0
    %p73 = por %p71, %p72
    %p74 = scmp.ne.s32.totalorder %s66, %s68
    %p75 = scmp.eq.s32.totalorder %s16, 1
    %p76 = por %p74, %p75
    %p77 = scmp.ne.s32.totalorder %s68, %s69
    %p78 = scmp.eq.s32.totalorder %s16, 0
    %p79 = por %p77, %p78
    %p80 = scmp.ne.s32.totalorder %s68, %s69
    %p81 = scmp.eq.s32.totalorder %s17, 1
    %p82 = por %p80, %p81
    %p84 = scmp.ne.s32.totalorder %s69, %s83
    %p85 = scmp.eq.s32.totalorder %s17, 0
    %p86 = por %p84, %p85
    %s88 = sadd.s32 %s87, 1
    %p91 = scmp.eq.s32.totalorder %s11, 1
    %p92 = scmp.ne.s32.totalorder %s87, %s89
    %p93 = scmp.eq.s32.totalorder %s11, 0
    %p94 = por %p92, %p93
    %p95 = scmp.ne.s32.totalorder %s87, %s89
    %p96 = scmp.eq.s32.totalorder %s16, 1
    %p97 = por %p95, %p96
    %p98 = scmp.ne.s32.totalorder %s89, %s90
    %p99 = scmp.eq.s32.totalorder %s16, 0
    %p100 = por %p98, %p99
    %p101 = scmp.ne.s32.totalorder %s89, %s90
    %p102 = scmp.eq.s32.totalorder %s17, 1
    %p103 = por %p101, %p102
    %p105 = scmp.ne.s32.totalorder %s90, %s104
    %p106 = scmp.eq.s32.totalorder %s17, 0
    %p107 = por %p105, %p106
    %s109 = sadd.s32 %s108, 1
    %p112 = scmp.eq.s32.totalorder %s11, 1
    %p113 = scmp.ne.s32.totalorder %s108, %s110
    %p114 = scmp.eq.s32.totalorder %s11, 0
    %p115 = por %p113, %p114
    %p116 = scmp.ne.s32.totalorder %s108, %s110
    %p117 = scmp.eq.s32.totalorder %s16, 1
    %p118 = por %p116, %p117
    %p119 = scmp.ne.s32.totalorder %s110, %s111
    %p120 = scmp.eq.s32.totalorder %s16, 0
    %p121 = por %p119, %p120
    %p122 = scmp.ne.s32.totalorder %s110, %s111
    %p123 = scmp.eq.s32.totalorder %s17, 1
    %p124 = por %p122, %p123
    %p126 = scmp.ne.s32.totalorder %s111, %s125
    %p127 = scmp.eq.s32.totalorder %s17, 0
    %p128 = por %p126, %p127
    %s129 = ssub.s32 %s11, %s18
    %p130 = scmp.eq.s32.totalorder %s129, 0
    %s132 = sadd.s32 %s131, 1
    %s133 = scalar_select %p130, %s131, %s132
    %p136 = pneg %p130
    %p137 = scmp.eq.s32.totalorder %s11, 1
    %p138 = por %p136, %p137
    %p139 = scmp.ne.s32.totalorder %s131, %s134
    %p140 = scmp.eq.s32.totalorder %s11, 0
    %p141 = por %p139, %p140
    %p142 = scmp.ne.s32.totalorder %s131, %s134
    %p143 = scmp.eq.s32.totalorder %s16, 1
    %p144 = por %p142, %p143
    %p145 = scmp.ne.s32.totalorder %s134, %s135
    %p146 = scmp.eq.s32.totalorder %s16, 0
    %p147 = por %p145, %p146
    %p148 = scmp.ne.s32.totalorder %s134, %s135
    %p149 = scmp.eq.s32.totalorder %s17, 1
    %p150 = por %p148, %p149
    %p152 = scmp.ne.s32.totalorder %s135, %s151
    %p153 = scmp.eq.s32.totalorder %s17, 0
    %p154 = por %p152, %p153
    %p155 = scmp.le.s32.totalorder 1, %s11
    %p156 = scmp.lt.s32.totalorder %s11, 3
    %p157 = pnand %p155, %p156
    %p158 = pneg %p157
    // Predicated region
    $region9: #{latent_space_forward.1} parent=5 // pred_check
      _
    $region10: #{latent_space_forward.1} parent=5 // pred_check_branch
      %160 = sbr.rel (%p157) target = $region12
    $region11: #{latent_space_forward.1} parent=5 // pred_region
      %s161 = ssub.s32 %s11, 1
      // Predicated region
      $region13: #{latent_space_forward.1} parent=11 // pred_check
        %p162 = pneg %p58
      $region14: #{latent_space_forward.1} parent=11 // pred_check_branch
        %164 = sbr.rel (%p162) target = $region16
      $region15: #{latent_space_forward.1} parent=11 // pred_region
        _
      $region16: #{latent_space_forward.1} parent=11 // pred_fallthru
        _
      // Predicated region
      $region17: #{latent_space_forward.1} parent=11 // pred_check
        %p165 = pneg %p79
      $region18: #{latent_space_forward.1} parent=11 // pred_check_branch
        %167 = sbr.rel (%p165) target = $region20
      $region19: #{latent_space_forward.1} parent=11 // pred_region
        _
      $region20: #{latent_space_forward.1} parent=11 // pred_fallthru
        _
      // Predicated region
      $region21: #{latent_space_forward.1} parent=11 // pred_check
        %p168 = pneg %p100
      $region22: #{latent_space_forward.1} parent=11 // pred_check_branch
        %170 = sbr.rel (%p168) target = $region24
      $region23: #{latent_space_forward.1} parent=11 // pred_region
        _
      $region24: #{latent_space_forward.1} parent=11 // pred_fallthru
        _
      // Predicated region
      $region25: #{latent_space_forward.1} parent=11 // pred_check
        %p171 = pneg %p121
      $region26: #{latent_space_forward.1} parent=11 // pred_check_branch
        %173 = sbr.rel (%p171) target = $region28
      $region27: #{latent_space_forward.1} parent=11 // pred_region
        _
      $region28: #{latent_space_forward.1} parent=11 // pred_fallthru
        _
    $region12: #{latent_space_forward.1} parent=5 // pred_fallthru
      _
    %p174 = scmp.lt.s32.totalorder %s11, 2
    // Predicated region
    $region29: #{latent_space_forward.1} parent=5 // pred_check
      %p175 = pneg %p174
    $region30: #{latent_space_forward.1} parent=5 // pred_check_branch
      %177 = sbr.rel (%p175) target = $region32
    $region31: #{latent_space_forward.1} parent=5 // pred_region
      // Predicated region
      $region33: #{latent_space_forward.1} parent=31 // pred_check
        %p178 = pneg %p31
      $region34: #{latent_space_forward.1} parent=31 // pred_check_branch
        %180 = sbr.rel (%p178) target = $region36
      $region35: #{latent_space_forward.1} parent=31 // pred_region
        %s181 = smul.u32 2, %s11
        %p182 = scmp.lt.s32.totalorder %s181, 3
        %s183 = scalar_select %p182, %s181, 3
        %s184 = smul.addr %s183, 4
        %s185 = scalar_lea.vmem %s0, %s184
        %s186 = smul.u32 2, %s11
      $region36: #{latent_space_forward.1} parent=31 // pred_fallthru
        _
    $region32: #{latent_space_forward.1} parent=5 // pred_fallthru
      _
    %p187 = scmp.le.s32.totalorder 1, %s11
    %p188 = scmp.lt.s32.totalorder %s11, 3
    %p189 = pnand %p187, %p188
    %p190 = pneg %p189
    // Predicated region
    $region37: #{latent_space_forward.1} parent=5 // pred_check
      _
    $region38: #{latent_space_forward.1} parent=5 // pred_check_branch
      %192 = sbr.rel (%p189) target = $region40
    $region39: #{latent_space_forward.1} parent=5 // pred_region
      %s193 = ssub.s32 %s11, 1
      %s194 = smul.u32 2, %s16
      %p195 = scmp.lt.s32.totalorder %s194, 3
      %s196 = scalar_select %p195, %s194, 3
      %s197 = smul.addr %s196, 4
      %s198 = scalar_lea.vmem %s0, %s197
      %p199 = pneg %p37
      %p200 = pneg %p34
      %p201 = pneg %p58
      %p202 = pneg %p55
      %p203 = pneg %p79
      %p204 = pneg %p76
      %p205 = pneg %p100
      %p206 = pneg %p97
      %p207 = pneg %p121
      %p208 = pneg %p118
      %p209 = pneg %p147
      %p210 = pneg %p144
      %s211 = smul.u32 2, %s16
      %p212 = scmp.lt.s32.totalorder %s211, 3
      %s213 = scalar_select %p212, %s211, 3
      %s214 = smul.addr %s213, 4
      %s215 = scalar_lea.vmem %s5, %s214
      %s216 = smul.u32 2, %s16
      %p217 = scmp.lt.s32.totalorder %s216, 3
      %s218 = scalar_select %p217, %s216, 3
      %s219 = smul.addr %s218, 4
      %s220 = scalar_lea.vmem %s0, %s219
      %s221 = smul.u32 2, %s16
      %s222 = smul.u32 2, %s16
      %p223 = scmp.lt.s32.totalorder %s222, 3
      %s224 = scalar_select %p223, %s222, 3
      %s225 = smul.addr %s224, 4
      %s226 = scalar_lea.vmem %s5, %s225
      %s227 = smul.u32 2, %s16
      %v228 = vld [vmem:[%s1] sm:$0xff]
      %v229 = vld [vmem:[%s1 + $0x8] sm:$0xff]
      %v230 = vld [vmem:[%s1 + $0x10] sm:$0xf]
      %v231 = vld [vmem:[%s220] sm:$0x77]
      %v232 = vld [vmem:[%s2] sm:$0xff]
      %v233 = vld [vmem:[%s2 + $0x8] sm:$0xff]
      %v234 = vld [vmem:[%s2 + $0x10] sm:$0xf]
      %236 = vset.pattern.permute.xlu0 0
      %237 = vperm.xlu0 %236, %v232
      %v238 = vpop.permute.xlu0 %237
      %241 = vset.pattern.permute.xlu0 0
      %242 = vperm.xlu0 %241, %v233
      %v243 = vpop.permute.xlu0 %242
      %246 = vset.pattern.permute.xlu0 0
      %247 = vperm.xlu0 %246, %v234
      %v248 = vpop.permute.xlu0 %247
      %251 = vst [vmem:[#allocation1] ss:$2 sm:$0xff] %v231
      %v252 = vld.sshfl [vmem:[#allocation1] sm:$0xff pattern:$0x75316420]
      %v253 = vld.sshfl [vmem:[#allocation1 + $0x8] sm:$0xff pattern:$0x75316420]
      %vm254 = vcmask 23552
      %v256 = vsel %vm254, %v228, 0
      %v259 = vsel %vm254, %v229, 0
      %v262 = vsel %vm254, %v230, 0
      %vm264 = vcmask 1042432
      %v265 = vsel %vm264, %v252, 0
      %v267 = vsel %vm264, %v253, 0
      %269 = vmatpush.msra.mxu0 0.0
      %270 = vmatpush.msra.mxu0 0.0
      %271 = vmatpush.msra.mxu0 0.0
      %272 = vmatpush.msra.mxu0 0.0
      %273 = vmatpush.msra.mxu0 0.0
      %274 = vmatpush.msra.mxu0 0.0
      %275 = vmatpush.msra.mxu0 0.0
      %276 = vmatpush.msra.mxu0 0.0
      %277 = vmatpush.msra.mxu0 0.0
      %278 = vmatpush.msra.mxu0 0.0
      %279 = vmatpush.msra.mxu0 0.0
      %280 = vmatpush.msra.mxu0 0.0
      %281 = vmatpush.msra.mxu0 0.0
      %282 = vmatpush.msra.mxu0 0.0
      %283 = vmatpush.msra.mxu0 0.0
      %284 = vmatpush.msra.mxu0 %v265
      %285 = vmatmul.f32.gmra.mxu0 %v256
      %v286 = vpop.f32.mrf.mxu0
      %v287 = vadd.f32 %v238, %v286
      %288 = vmatmul.f32.gmra.mxu0 %v259
      %v289 = vpop.f32.mrf.mxu0
      %v290 = vadd.f32 %v243, %v289
      %291 = vmatmul.f32.gmra.mxu0 %v262
      %v292 = vpop.f32.mrf.mxu0
      %v293 = vadd.f32 %v248, %v292
      %294 = vdwg.mxu0
      %295 = vmatpush.msra.mxu0 0.0
      %296 = vmatpush.msra.mxu0 0.0
      %297 = vmatpush.msra.mxu0 0.0
      %298 = vmatpush.msra.mxu0 0.0
      %299 = vmatpush.msra.mxu0 0.0
      %300 = vmatpush.msra.mxu0 0.0
      %301 = vmatpush.msra.mxu0 0.0
      %302 = vmatpush.msra.mxu0 0.0
      %303 = vmatpush.msra.mxu0 0.0
      %304 = vmatpush.msra.mxu0 0.0
      %305 = vmatpush.msra.mxu0 0.0
      %306 = vmatpush.msra.mxu0 0.0
      %307 = vmatpush.msra.mxu0 0.0
      %308 = vmatpush.msra.mxu0 0.0
      %309 = vmatpush.msra.mxu0 0.0
      %310 = vmatpush.msra.mxu0 %v267
      %311 = vmatmul.f32.gmra.mxu0 %v256
      %v312 = vpop.f32.mrf.mxu0
      %v313 = vadd.f32 %v238, %v312
      %314 = vmatmul.f32.gmra.mxu0 %v259
      %v315 = vpop.f32.mrf.mxu0
      %v316 = vadd.f32 %v243, %v315
      %317 = vmatmul.f32.gmra.mxu0 %v262
      %v318 = vpop.f32.mrf.mxu0
      %v319 = vadd.f32 %v248, %v318
      %320 = vdwg.mxu0
      %v321 = vtanh.pop %v287
      %v322 = vtanh.pop %v313
      %v323 = vtanh.pop %v290
      %v324 = vtanh.pop %v316
      %v325 = vtanh.pop %v293
      %v326 = vtanh.pop %v319
      %v327 = vld [vmem:[%s3] sm:$0xf]
      %v328 = vld [vmem:[%s4] sm:$0xf]
      %330 = vset.pattern.permute.xlu0 0
      %331 = vperm.xlu0 %330, %v328
      %v332 = vpop.permute.xlu0 %331
      %vm334 = vcmask 162816
      %v336 = vsel %vm334, %v327, 0
      %vm338 = vcmask 1043456
      %v340 = vsel %vm338, %v325, 0
      %v343 = vsel %vm338, %v326, 0
      %345 = vmatpush.msra.mxu0 0.0
      %346 = vmatpush.msra.mxu0 0.0
      %347 = vmatpush.msra.mxu0 0.0
      %348 = vmatpush.msra.mxu0 0.0
      %349 = vmatpush.msra.mxu0 0.0
      %350 = vmatpush.msra.mxu0 0.0
      %351 = vmatpush.msra.mxu0 0.0
      %352 = vmatpush.msra.mxu0 0.0
      %353 = vmatpush.msra.mxu0 0.0
      %354 = vmatpush.msra.mxu0 0.0
      %355 = vmatpush.msra.mxu0 0.0
      %356 = vmatpush.msra.mxu0 0.0
      %357 = vmatpush.msra.mxu0 0.0
      %358 = vmatpush.msra.mxu0 %v340
      %359 = vmatpush.msra.mxu0 %v323
      %360 = vmatpush.msra.mxu0 %v321
      %361 = vmatmul.f32.gmra.mxu0 %v336
      %v362 = vpop.f32.mrf.mxu0
      %v363 = vadd.f32 %v332, %v362
      %364 = vdwg.mxu0
      %365 = vmatpush.msra.mxu0 0.0
      %366 = vmatpush.msra.mxu0 0.0
      %367 = vmatpush.msra.mxu0 0.0
      %368 = vmatpush.msra.mxu0 0.0
      %369 = vmatpush.msra.mxu0 0.0
      %370 = vmatpush.msra.mxu0 0.0
      %371 = vmatpush.msra.mxu0 0.0
      %372 = vmatpush.msra.mxu0 0.0
      %373 = vmatpush.msra.mxu0 0.0
      %374 = vmatpush.msra.mxu0 0.0
      %375 = vmatpush.msra.mxu0 0.0
      %376 = vmatpush.msra.mxu0 0.0
      %377 = vmatpush.msra.mxu0 0.0
      %378 = vmatpush.msra.mxu0 %v343
      %379 = vmatpush.msra.mxu0 %v324
      %380 = vmatpush.msra.mxu0 %v322
      %381 = vmatmul.f32.gmra.mxu0 %v336
      %v382 = vpop.f32.mrf.mxu0
      %v383 = vadd.f32 %v332, %v382
      %384 = vdwg.mxu0
      %v385 = vtanh.pop %v363
      %v386 = vtanh.pop %v383
      %v387 = vmul.f32 %v385, 0.5
      %v388 = vmul.f32 %v386, 0.5
      %v389 = vadd.f32 %v387, 0.5
      %v390 = vadd.f32 %v388, 0.5
      %v393 = vrot.slane %v390, 4
      %v394 = vsel %vm338, %v389, %v393
      %396 = vst [vmem:[%s226] sm:$0xff] %v394
      %s397 = smul.u32 2, %s16
      %p398 = scmp.lt.s32.totalorder %s397, 3
      %s399 = scalar_select %p398, %s397, 3
      %s400 = smul.addr %s399, 4
      %s401 = scalar_lea.vmem %s5, %s400
      // Predicated region
      $region41: #{latent_space_forward.1} parent=39 // pred_check
        %p402 = pneg %p144
      $region42: #{latent_space_forward.1} parent=39 // pred_check_branch
        %404 = sbr.rel (%p402) target = $region44
      $region43: #{latent_space_forward.1} parent=39 // pred_region
        %s405 = smul.u32 2, %s16
      $region44: #{latent_space_forward.1} parent=39 // pred_fallthru
        _
    $region40: #{latent_space_forward.1} parent=5 // pred_fallthru
      _
    %p406 = scmp.le.s32.totalorder 2, %s11
    // Predicated region
    $region45: #{latent_space_forward.1} parent=5 // pred_check
      %p407 = pneg %p406
    $region46: #{latent_space_forward.1} parent=5 // pred_check_branch
      %409 = sbr.rel (%p407) target = $region48
    $region47: #{latent_space_forward.1} parent=5 // pred_region
      %s410 = ssub.s32 %s11, 2
      // Predicated region
      $region49: #{latent_space_forward.1} parent=47 // pred_check
        %p411 = pneg %p150
      $region50: #{latent_space_forward.1} parent=47 // pred_check_branch
        %413 = sbr.rel (%p411) target = $region52
      $region51: #{latent_space_forward.1} parent=47 // pred_region
        %s414 = smul.u32 2, %s17
        %p415 = scmp.lt.s32.totalorder %s414, 3
        %s416 = scalar_select %p415, %s414, 3
        %s417 = smul.addr %s416, 4
        %s418 = scalar_lea.vmem %s5, %s417
      $region52: #{latent_space_forward.1} parent=47 // pred_fallthru
        _
    $region48: #{latent_space_forward.1} parent=5 // pred_fallthru
      _
  $region6: #{latent_space_forward.1} parent=0 // loop_footer
    %s15 = sadd.s32 1, %s11
  $region7: #{latent_space_forward.1} parent=0 // loop_footer_branch
    %10 = sbr.rel target = $region3
  $region8: #{latent_space_forward.1} parent=0 // loop_exit
    _

</llo_original>
